<compile_context>
chip_gen: v5e
topology: v5e:2x2
jax: 0.10.0
libtpu: 0.0.40
codegen_flags: <defaults>
</compile_context>

<pallas_src>
import functools

import jax
import jax.numpy as jnp
from jax.experimental import pallas as pl
from jax.experimental.pallas import tpu as pltpu


def _dcan_kernel(x_ref, w_ref, o_ref, *, cin, kk):
    # x_ref : (1, Cin, TM)       input pixel tile, pixels on lanes
    # w_ref : (KKOC, Cin + 4)    resident params: [w1 | b1 | wd | wc | b2]
    # o_ref : (1, KKOC, TM)      rows ordered (oc, kh, kw), pixels on lanes
    w_all = w_ref[...]
    w1 = w_all[:, :cin]                  # (KKOC, Cin)  ConvTranspose2d taps
    b1 = w_all[:, cin:cin + 1]           # (KKOC, 1)    ConvTranspose2d bias / row
    wd = w_all[:, cin + 1:cin + 2]       # (KKOC, 1)    1x1 conv same-channel weight
    wc = w_all[:, cin + 2:cin + 3]       # (KKOC, 1)    1x1 conv cross-channel weight
    b2 = w_all[:, cin + 3:cin + 4]       # (KKOC, 1)    1x1 conv bias / row

    x = x_ref[0]                                                   # (Cin, TM)
    up = jnp.dot(w1, x, preferred_element_type=jnp.float32)        # MXU matmul
    up = jnp.maximum(up + b1, 0.0)                                 # ReLU after ConvTranspose2d
    up_sw = pltpu.roll(up, shift=kk, axis=0)                       # swap channel halves (XLU)
    out = wd * up + wc * up_sw + b2                                # 1x1 Conv2d (VPU)
    o_ref[0] = jnp.maximum(out, 0.0)                               # ReLU after 1x1 conv


def _round_up(a, b):
    return (a + b - 1) // b * b


def _cdiv(a, b):
    return (a + b - 1) // b


def dcan_upsample_conv_block(x, w_up, b_up, w_conv, b_conv, *,
                             kernel_size, stride, out_dim, tm_max=32768):
    """x: (B, Cin, H, W) float32 NCHW.  Returns (B, 2, out_dim, out_dim) float32."""
    B, Cin, H, W = x.shape
    k = kernel_size
    OC = w_up.shape[1]  # = 2 (fixed by the module)
    assert OC == 2 and tuple(w_conv.shape[:2]) == (2, 2), "module is fixed to 2 channels"
    assert stride == k, "implemented for the non-overlapping case kernel_size == stride"
    assert out_dim == H * stride and out_dim == W * stride, \
        "out_dim must equal natural transposed-conv output size (output_padding == 0)"

    kk = k * k
    KKOC = OC * kk
    HW = H * W

    # --- parameter plumbing (plain JAX glue on tiny tensors) ---
    # ConvTranspose2d weight (Cin, OC, kh, kw) -> (OC, kh, kw, Cin) -> (KKOC, Cin)
    w1 = jnp.transpose(w_up, (1, 2, 3, 0)).reshape(KKOC, Cin).astype(jnp.float32)
    b1 = jnp.repeat(b_up.astype(jnp.float32), kk).reshape(KKOC, 1)
    # 1x1 conv: out[o2] = w2[o2,0]*u[0] + w2[o2,1]*u[1] + b[o2]
    w2 = w_conv.reshape(OC, OC).astype(jnp.float32)
    wd = jnp.repeat(jnp.diagonal(w2), kk).reshape(KKOC, 1)                  # same channel
    wc = jnp.repeat(jnp.stack([w2[0, 1], w2[1, 0]]), kk).reshape(KKOC, 1)   # cross channel
    b2 = jnp.repeat(b_conv.astype(jnp.float32), kk).reshape(KKOC, 1)
    # single resident parameter operand: (KKOC, Cin + 4)
    w_all = jnp.concatenate([w1, b1, wd, wc, b2], axis=1)

    # Metadata-only reshape: pixels of each image become the lane axis,
    # no XLA transpose / copy of the input.
    xf = x.reshape(B, Cin, HW).astype(jnp.float32)

    # --- pixel-tile (TM) selection: step-count derived, VMEM-budgeted ---
    if HW % 128 == 0:
        # double-buffered input + output block bytes per pixel lane
        lane_bytes = 4 * 2 * (_round_up(Cin, 8) + _round_up(KKOC, 8))
        tm_budget = max(128, (24 * 1024 * 1024 // lane_bytes) // 128 * 128)
        tm_cap = max(128, min(tm_max, tm_budget))
        n_m = max(1, _cdiv(HW, tm_cap))
        if B * n_m < 2 and HW >= 256:
            n_m = 2                      # keep >= 2 grid steps (v7x megacore)
        TM = min(HW, _round_up(_cdiv(HW, n_m), 128))
        n_m = _cdiv(HW, TM)              # Pallas clips the (rare) partial tail block
    else:
        # fall back to one full-image block per batch (lane dim == full array dim)
        TM = HW
        n_m = 1
    grid = (B, n_m)

    cost = pl.CostEstimate(
        flops=2 * B * HW * Cin * KKOC + 4 * B * HW * KKOC,
        transcendentals=0,
        bytes_accessed=4 * (B * Cin * HW + B * KKOC * HW + KKOC * (Cin + 4)))

    kernel = functools.partial(_dcan_kernel, cin=Cin, kk=kk)
    out_flat = pl.pallas_call(
        kernel,
        out_shape=jax.ShapeDtypeStruct((B, KKOC, HW), jnp.float32),
        grid=grid,
        in_specs=[
            pl.BlockSpec((1, Cin, TM), lambda b, m: (b, 0, m)),       # x tile, pipelined
            pl.BlockSpec((KKOC, Cin + 4), lambda b, m: (0, 0)),       # params (resident)
        ],
        out_specs=pl.BlockSpec((1, KKOC, TM), lambda b, m: (b, 0, m)),
        compiler_params=pltpu.CompilerParams(
            dimension_semantics=("parallel", "parallel"),             # megacore-shardable
            vmem_limit_bytes=48 * 1024 * 1024),                       # fits v7x's 64 MiB
        cost_estimate=cost,
    )(xf, w_all)

    # (B, KKOC, HW): rows = (oc, kh, kw), lanes = (h, w)
    #   -> (B, oc, kh, kw, h, w) -> (B, oc, h, kh, w, kw) -> (B, OC, out_dim, out_dim)
    # TODO(synk): fusing this into the kernel needs a cross-lane (w, kw) interleave;
    # left as one XLA transpose for robustness (see header note).
    out = out_flat.reshape(B, OC, k, k, H, W)
    out = jnp.transpose(out, (0, 1, 4, 2, 5, 3)).reshape(B, OC, out_dim, out_dim)
    return out


def _reference(x, w_up, b_up, w_conv, b_conv, out_dim):
    """Pure-JAX reference for the non-overlapping transposed conv case."""
    B = x.shape[0]
    OC = w_up.shape[1]
    up = jnp.einsum('bihw,iokl->bohkwl', x, w_up).reshape(B, OC, out_dim, out_dim)
    up = jnp.maximum(up + b_up[None, :, None, None], 0.0)
    w2 = w_conv.reshape(OC, OC)
    out = jnp.einsum('oc,bchw->bohw', w2, up) + b_conv[None, :, None, None]
    return jnp.maximum(out, 0.0)


if __name__ == "__main__":
    # B=2, Cin=4, H=W=16, kernel=stride=2 -> out_dim=32.
    B, Cin, H, W = 2, 4, 16, 16
    kernel_size, stride, out_dim = 2, 2, 32
    OC = 2  # fixed by the module definition

    key = jax.random.PRNGKey(0)
    kx, kw1, kb1, kw2, kb2 = jax.random.split(key, 5)

    x = jax.random.normal(kx, (B, Cin, H, W), dtype=jnp.float32)
    # ConvTranspose2d(Cin, 2): weight (Cin, 2, k, k), bias (2,)
    w_up = 0.2 * jax.random.normal(kw1, (Cin, OC, kernel_size, kernel_size), dtype=jnp.float32)
    b_up = 0.1 * jax.random.normal(kb1, (OC,), dtype=jnp.float32)
    # Conv2d(2, 2, kernel_size=1): weight (2, 2, 1, 1), bias (2,)
    w_conv = 0.2 * jax.random.normal(kw2, (OC, OC, 1, 1), dtype=jnp.float32)
    b_conv = 0.1 * jax.random.normal(kb2, (OC,), dtype=jnp.float32)

    ref = _reference(x, w_up, b_up, w_conv, b_conv, out_dim)

    # Default (large) tile: whole image per step, grid (B, 1).
    out = dcan_upsample_conv_block(
        x, w_up, b_up, w_conv, b_conv,
        kernel_size=kernel_size, stride=stride, out_dim=out_dim)
    out = jax.block_until_ready(out)
    assert out.shape == (B, OC, out_dim, out_dim), out.shape
    assert jnp.allclose(out, ref, atol=1e-4, rtol=1e-4), "mismatch vs reference (single m-block)"

    # Small tile: exercises the multi-block pipelined path (grid (2, 2)).
    out_tiled = dcan_upsample_conv_block(
        x, w_up, b_up, w_conv, b_conv,
        kernel_size=kernel_size, stride=stride, out_dim=out_dim, tm_max=128)
    out_tiled = jax.block_until_ready(out_tiled)
    assert jnp.allclose(out_tiled, ref, atol=1e-4, rtol=1e-4), "mismatch vs reference (tiled)"

    print("KERNEL_OK")
</pallas_src>

<mosaic_0001>
module attributes {stable_mosaic.version = 11 : i64} {
  func.func @_dcan_kernel(%arg0: i32, %arg1: i32, %arg2: memref<1x4x256xf32, #tpu.memory_space<vmem>>, %arg3: memref<8x8xf32, #tpu.memory_space<vmem>>, %arg4: memref<1x8x256xf32, #tpu.memory_space<vmem>>) attributes {dimension_semantics = [#tpu.dimension_semantics<parallel>, #tpu.dimension_semantics<parallel>], iteration_bounds = array<i64: 2, 1>, scalar_prefetch = 0 : i64, scratch_operands = 0 : i64, tpu.core_type = #tpu.core_type<tc>, window_params = [{transform_indices = @transform_0, window_bounds = array<i64: 1, 4, 256>}, {pipeline_mode = #tpu.pipeline_mode<synchronous>, transform_indices = @transform_1, window_bounds = array<i64: 8, 8>}, {transform_indices = @transform_2, window_bounds = array<i64: 1, 8, 256>}]} {
    %c0 = arith.constant 0 : index
    %c0_0 = arith.constant 0 : index
    %0 = vector.load %arg3[%c0, %c0_0] : memref<8x8xf32, #tpu.memory_space<vmem>>, vector<8x8xf32>
    %1 = vector.extract_strided_slice %0 {offsets = [0, 0], sizes = [8, 4], strides = [1, 1]} : vector<8x8xf32> to vector<8x4xf32>
    %2 = vector.extract_strided_slice %0 {offsets = [0, 4], sizes = [8, 1], strides = [1, 1]} : vector<8x8xf32> to vector<8x1xf32>
    %3 = vector.extract_strided_slice %0 {offsets = [0, 5], sizes = [8, 1], strides = [1, 1]} : vector<8x8xf32> to vector<8x1xf32>
    %4 = vector.extract_strided_slice %0 {offsets = [0, 6], sizes = [8, 1], strides = [1, 1]} : vector<8x8xf32> to vector<8x1xf32>
    %5 = vector.extract_strided_slice %0 {offsets = [0, 7], sizes = [8, 1], strides = [1, 1]} : vector<8x8xf32> to vector<8x1xf32>
    %c0_1 = arith.constant 0 : index
    %c0_2 = arith.constant 0 : index
    %c0_3 = arith.constant 0 : index
    %6 = vector.load %arg2[%c0_1, %c0_2, %c0_3] : memref<1x4x256xf32, #tpu.memory_space<vmem>>, vector<1x4x256xf32>
    %7 = vector.shape_cast %6 : vector<1x4x256xf32> to vector<4x256xf32>
    %cst = arith.constant dense<0.000000e+00> : vector<8x256xf32>
    %8 = tpu.matmul %1, %7, %cst {dimension_numbers = #tpu.dot_dimension_numbers<[1], [0], [0], [1], [0, 0, 1, 1], [], []>} : vector<8x4xf32>, vector<4x256xf32>, vector<8x256xf32> -> vector<8x256xf32>
    %9 = vector.broadcast %2 : vector<8x1xf32> to vector<8x256xf32>
    %10 = arith.addf %8, %9 : vector<8x256xf32>
    %cst_4 = arith.constant 0.000000e+00 : f32
    %11 = vector.broadcast %cst_4 : f32 to vector<8x256xf32>
    %12 = arith.maximumf %10, %11 : vector<8x256xf32>
    %c4_i32 = arith.constant 4 : i32
    %13 = tpu.dynamic_rotate %12 by %c4_i32 dim 0 : vector<8x256xf32>, i32 -> vector<8x256xf32>
    %14 = vector.broadcast %3 : vector<8x1xf32> to vector<8x256xf32>
    %15 = arith.mulf %14, %12 : vector<8x256xf32>
    %16 = vector.broadcast %4 : vector<8x1xf32> to vector<8x256xf32>
    %17 = arith.mulf %16, %13 : vector<8x256xf32>
    %18 = arith.addf %15, %17 : vector<8x256xf32>
    %19 = vector.broadcast %5 : vector<8x1xf32> to vector<8x256xf32>
    %20 = arith.addf %18, %19 : vector<8x256xf32>
    %cst_5 = arith.constant 0.000000e+00 : f32
    %21 = vector.broadcast %cst_5 : f32 to vector<8x256xf32>
    %22 = arith.maximumf %20, %21 : vector<8x256xf32>
    %c0_6 = arith.constant 0 : index
    %c0_7 = arith.constant 0 : index
    %c0_8 = arith.constant 0 : index
    %23 = vector.load %arg4[%c0_6, %c0_7, %c0_8] : memref<1x8x256xf32, #tpu.memory_space<vmem>>, vector<1x8x256xf32>
    %24 = vector.shape_cast %23 : vector<1x8x256xf32> to vector<8x256xf32>
    %25 = vector.shape_cast %22 : vector<8x256xf32> to vector<1x8x256xf32>
    tpu.vector_store %arg4[%c0_6, %c0_7, %c0_8], %25 {strides = array<i32>} : memref<1x8x256xf32, #tpu.memory_space<vmem>>, vector<1x8x256xf32>,
    return
  }
  func.func @transform_0(%arg0: i32, %arg1: i32) -> (i32, i32, i32) {
    %c0_i32 = arith.constant 0 : i32
    %c0_i32_0 = arith.constant 0 : i32
    return %arg0, %c0_i32, %arg1 : i32, i32, i32
  }
  func.func @transform_1(%arg0: i32, %arg1: i32) -> (i32, i32) {
    %c0_i32 = arith.constant 0 : i32
    %c0_i32_0 = arith.constant 0 : i32
    %c0_i32_1 = arith.constant 0 : i32
    return %c0_i32, %c0_i32_0 : i32, i32
  }
  func.func @transform_2(%arg0: i32, %arg1: i32) -> (i32, i32, i32) {
    %c0_i32 = arith.constant 0 : i32
    %c0_i32_0 = arith.constant 0 : i32
    return %arg0, %c0_i32, %arg1 : i32, i32, i32
  }
}

</mosaic_0001>

<llo_original>
// kernel: tpu_custom_call.1
$region0: #{tpu_custom_call.1}
  #allocation0 [shape = 'u32[]', space=smem, size = 0x4, offset = 0x4, fixed_abs, tag = 'smem constant byte address 0x4 - core index']
  #allocation1 [shape = 'u32[72,128]{1,0:T(1,128)}', space=vmem, size = 0x9000, scoped, tag = 'internal scratch']
  %s0 = inlined_call_operand.hbm [shape: f32[2,4,256], index: 0, kind: input, shape index: {}]
  %s1 = inlined_call_operand.hbm [shape: f32[8,8], index: 1, kind: input, shape index: {}]
  %s2 = inlined_call_operand.hbm [shape: f32[2,8,256], index: 2, kind: output, shape index: {}]
  %s3 = sld [smem:[#allocation0]]
  $region49: #{tpu_custom_call.1} parent=0
    _
  %s5 = ssub.s32 1, %s3
  %s6 = scalar_select 0, %s5, %s3
  $region1: #{tpu_custom_call.1} parent=0
    #allocation2 [shape = 'u8[8192]{0}', space=vmem, size = 0x2000, scoped, tag = 'input window, operand 0']
    #allocation3 [shape = 's32[2]{0}', space=sflag, size = 0x8, scoped, tag = 'scoped memory for tpu_custom_call.1']
    #allocation4 [shape = 's32[2]{0}', space=sflag, size = 0x8, scoped, tag = 'scoped memory for tpu_custom_call.1']
    #allocation5 [shape = 'u8[4096]{0}', space=vmem, size = 0x1000, scoped, tag = 'input window, operand 1, single buffered']
    #allocation6 [shape = 's32[1]{0}', space=sflag, size = 0x4, scoped, tag = 'scoped memory for tpu_custom_call.1']
    #allocation7 [shape = 'u8[16384]{0}', space=vmem, size = 0x4000, scoped, tag = 'output window, operand 0']
    %7 = vsyncpa [#allocation3], 0
    %s8 = scalar_lea.sflag [#allocation3], 1
    %9 = vsyncpa %s8, 0
    %10 = vsyncpa [#allocation6], 0
    %11 = vsyncpa [#allocation4], 0
    %s12 = scalar_lea.sflag [#allocation4], 1
    %13 = vsyncpa %s12, 0
    loop: start=0, step=1, limit=4
    $region2: #{tpu_custom_call.1} parent=1 // loop_pre_header
      _
    $region3: #{tpu_custom_call.1} parent=1 // loop_header
      %s15 = sphi 0, %s19
      %p16 = scmp.ge.s32.totalorder %s15, 4
      %s22 = sphi 0, %s34
      %s23 = sphi 0, %s30
      %s24 = sphi 0, %s22
      %s25 = sphi 0, %s23
      %s26 = sphi 0, %s24
      %s27 = sphi 0, %s25
      %s39 = sphi 0, %s41
      %s42 = sphi 0, %s39
      %s43 = sphi 0, %s42
      %s59 = sphi 0, %s43
      %s63 = sphi 0, %s63
      %s65 = sphi 0, %s63
      %s66 = sphi 0, %s65
      %s80 = sphi 0, %s66
      %s88 = sphi 0, %s90
      %s91 = sphi 0, %s88
      %s92 = sphi 0, %s91
      %s108 = sphi 0, %s92
    $region4: #{tpu_custom_call.1} parent=1 // loop_header_branch
      %18 = sbr.rel (%p16) target = $region8
    $region5: #{tpu_custom_call.1} parent=1 // loop_body
      %s20 = ssub.s32 %s15, 1
      %s21 = ssub.s32 %s15, 2
      %s28 = sadd.s32 1, %s23
      %p29 = scmp.ge.s32.totalorder %s28, 1
      %s30 = scalar_select %p29, 0, %s28
      %s31 = sadd.s32 1, %s22
      %s32 = scalar_select %p29, %s31, %s22
      %p33 = scmp.ge.s32.totalorder %s32, 2
      %s34 = scalar_select %p33, 0, %s32
      %s35 = ssub.s32 %s22, %s34
      %s36 = ssub.s32 %s23, %s30
      %s37 = sor.u32 %s35, %s36
      %p38 = scmp.eq.s32.totalorder %s37, 0
      %s40 = sadd.s32 %s39, 1
      %s41 = scalar_select %p38, %s39, %s40
      %p44 = pneg %p38
      %p45 = scmp.eq.s32.totalorder %s15, 1
      %p46 = por %p44, %p45
      %p47 = scmp.ne.s32.totalorder %s39, %s42
      %p48 = scmp.eq.s32.totalorder %s15, 0
      %p49 = por %p47, %p48
      %p50 = scmp.ne.s32.totalorder %s39, %s42
      %p51 = scmp.eq.s32.totalorder %s20, 1
      %p52 = por %p50, %p51
      %p53 = scmp.ne.s32.totalorder %s42, %s43
      %p54 = scmp.eq.s32.totalorder %s20, 0
      %p55 = por %p53, %p54
      %p56 = scmp.ne.s32.totalorder %s42, %s43
      %p57 = scmp.eq.s32.totalorder %s21, 1
      %p58 = por %p56, %p57
      %p60 = scmp.ne.s32.totalorder %s43, %s59
      %p61 = scmp.eq.s32.totalorder %s21, 0
      %p62 = por %p60, %p61
      %s64 = sadd.s32 %s63, 1
      %p67 = scmp.eq.s32.totalorder %s15, 1
      %p68 = scmp.ne.s32.totalorder %s63, %s65
      %p69 = scmp.eq.s32.totalorder %s15, 0
      %p70 = por %p68, %p69
      %p71 = scmp.ne.s32.totalorder %s63, %s65
      %p72 = scmp.eq.s32.totalorder %s20, 1
      %p73 = por %p71, %p72
      %p74 = scmp.ne.s32.totalorder %s65, %s66
      %p75 = scmp.eq.s32.totalorder %s20, 0
      %p76 = por %p74, %p75
      %p77 = scmp.ne.s32.totalorder %s65, %s66
      %p78 = scmp.eq.s32.totalorder %s21, 1
      %p79 = por %p77, %p78
      %p81 = scmp.ne.s32.totalorder %s66, %s80
      %p82 = scmp.eq.s32.totalorder %s21, 0
      %p83 = por %p81, %p82
      %s84 = ssub.s32 %s22, %s34
      %s85 = ssub.s32 %s23, %s30
      %s86 = sor.u32 %s84, %s85
      %p87 = scmp.eq.s32.totalorder %s86, 0
      %s89 = sadd.s32 %s88, 1
      %s90 = scalar_select %p87, %s88, %s89
      %p93 = pneg %p87
      %p94 = scmp.eq.s32.totalorder %s15, 1
      %p95 = por %p93, %p94
      %p96 = scmp.ne.s32.totalorder %s88, %s91
      %p97 = scmp.eq.s32.totalorder %s15, 0
      %p98 = por %p96, %p97
      %p99 = scmp.ne.s32.totalorder %s88, %s91
      %p100 = scmp.eq.s32.totalorder %s20, 1
      %p101 = por %p99, %p100
      %p102 = scmp.ne.s32.totalorder %s91, %s92
      %p103 = scmp.eq.s32.totalorder %s20, 0
      %p104 = por %p102, %p103
      %p105 = scmp.ne.s32.totalorder %s91, %s92
      %p106 = scmp.eq.s32.totalorder %s21, 1
      %p107 = por %p105, %p106
      %p109 = scmp.ne.s32.totalorder %s92, %s108
      %p110 = scmp.eq.s32.totalorder %s21, 0
      %p111 = por %p109, %p110
      %p112 = scmp.le.s32.totalorder 1, %s15
      %p113 = scmp.lt.s32.totalorder %s15, 3
      %p114 = pnand %p112, %p113
      %p115 = pneg %p114
      // Predicated region
      $region9: #{tpu_custom_call.1} parent=5 // pred_check
        _
      $region10: #{tpu_custom_call.1} parent=5 // pred_check_branch
        %117 = sbr.rel (%p114) target = $region12
      $region11: #{tpu_custom_call.1} parent=5 // pred_region
        %s118 = ssub.s32 %s15, 1
        // Predicated region
        $region13: #{tpu_custom_call.1} parent=11 // pred_check
          %p119 = pneg %p76
        $region14: #{tpu_custom_call.1} parent=11 // pred_check_branch
          %121 = sbr.rel (%p119) target = $region16
        $region15: #{tpu_custom_call.1} parent=11 // pred_region
          %123 = vsyncadd [#allocation6], 0
          %s125 = sshll.u32 %s1, 4
          %s126 = int_to_ptr.hbm [resolvable:$true] %s125
          %s127 = sshll.u32 [#allocation5], 4
          %s128 = int_to_ptr.vmem [resolvable:$true] %s127
          %130 = dma.hbm_to_vmem [thread:$0]  %s126, 128, %s128, [#allocation6]
        $region16: #{tpu_custom_call.1} parent=11 // pred_fallthru
          _
      $region12: #{tpu_custom_call.1} parent=5 // pred_fallthru
        _
      %p131 = scmp.lt.s32.totalorder %s15, 2
      // Predicated region
      $region17: #{tpu_custom_call.1} parent=5 // pred_check
        %p132 = pneg %p131
      $region18: #{tpu_custom_call.1} parent=5 // pred_check_branch
        %134 = sbr.rel (%p132) target = $region20
      $region19: #{tpu_custom_call.1} parent=5 // pred_region
        // Predicated region
        $region21: #{tpu_custom_call.1} parent=19 // pred_check
          %p135 = pneg %p49
        $region22: #{tpu_custom_call.1} parent=19 // pred_check_branch
          %137 = sbr.rel (%p135) target = $region24
        $region23: #{tpu_custom_call.1} parent=19 // pred_region
          %s138 = sand.u32 %s39, 1
          %s139 = scalar_lea.sflag [#allocation3], %s138
          %s140 = sand.u32 %s39, 1
          %s141 = smul.addr %s140, 8
          %s142 = scalar_lea.vmem [#allocation2], %s141
          %s143 = smul.u32 2, %s23
          %145 = vsyncadd %s139, 0
          %s146 = smul.addr %s22, 2
          %s147 = sadd.s32 %s143, %s146
          %s148 = smul.addr %s147, 4
          %s149 = scalar_lea.hbm %s0, %s148
          %s151 = sshll.u32 %s149, 4
          %s152 = int_to_ptr.hbm [resolvable:$true] %s151
          %s153 = sshll.u32 %s142, 4
          %s154 = int_to_ptr.vmem [resolvable:$true] %s153
          %156 = dma.hbm_to_vmem [thread:$0]  %s152, 128, %s154, %s139
        $region24: #{tpu_custom_call.1} parent=19 // pred_fallthru
          _
      $region20: #{tpu_custom_call.1} parent=5 // pred_fallthru
        _
      %p157 = scmp.le.s32.totalorder 1, %s15
      %p158 = scmp.lt.s32.totalorder %s15, 3
      %p159 = pnand %p157, %p158
      %p160 = pneg %p159
      // Predicated region
      $region25: #{tpu_custom_call.1} parent=5 // pred_check
        _
      $region26: #{tpu_custom_call.1} parent=5 // pred_check_branch
        %162 = sbr.rel (%p159) target = $region28
      $region27: #{tpu_custom_call.1} parent=5 // pred_region
        %s163 = ssub.s32 %s15, 1
        %s164 = sand.u32 %s42, 1
        %s165 = scalar_lea.sflag [#allocation3], %s164
        %s166 = sand.u32 %s42, 1
        %s167 = smul.addr %s166, 8
        %s168 = scalar_lea.vmem [#allocation2], %s167
        // Predicated region
        $region29: #{tpu_custom_call.1} parent=27 // pred_check
          %p169 = pneg %p55
        $region30: #{tpu_custom_call.1} parent=27 // pred_check_branch
          %171 = sbr.rel (%p169) target = $region32
        $region31: #{tpu_custom_call.1} parent=27 // pred_region
          %173 = dma.done %s165, 128
        $region32: #{tpu_custom_call.1} parent=27 // pred_fallthru
          _
        // Predicated region
        $region33: #{tpu_custom_call.1} parent=27 // pred_check
          %p174 = pneg %p76
        $region34: #{tpu_custom_call.1} parent=27 // pred_check_branch
          %176 = sbr.rel (%p174) target = $region36
        $region35: #{tpu_custom_call.1} parent=27 // pred_region
          %178 = dma.done [#allocation6], 128
        $region36: #{tpu_custom_call.1} parent=27 // pred_fallthru
          _
        %s179 = sand.u32 %s42, 1
        %s180 = scalar_lea.sflag [#allocation3], %s179
        %s181 = sand.u32 %s42, 1
        %s182 = smul.addr %s181, 8
        %s183 = scalar_lea.vmem [#allocation2], %s182
        %p184 = pneg %p55
        %p185 = pneg %p52
        %p186 = pneg %p76
        %p187 = pneg %p73
        %p188 = pneg %p104
        %p189 = pneg %p101
        %s190 = sand.u32 %s91, 1
        %s191 = scalar_lea.sflag [#allocation4], %s190
        %s192 = sand.u32 %s91, 1
        %s193 = smul.addr %s192, 16
        %s194 = scalar_lea.vmem [#allocation7], %s193
        %s195 = smul.u32 2, %s25
        %s196 = smul.u32 2, %s25
        %v197 = vld [vmem:[#allocation5] sm:$0xff]
        %v198 = vld [vmem:[%s168] sm:$0xff]
        %200 = vset.pattern.permute.xlu0 4
        %201 = vperm.xlu0 %200, %v197
        %v202 = vpop.permute.xlu0 %201
        %205 = vst [vmem:[#allocation1] ss:$2 sm:$0xff] %v198
        %v206 = vld.sshfl [vmem:[#allocation1] sm:$0xff pattern:$0x75316420]
        %v207 = vld.sshfl [vmem:[#allocation1 + $0x8] sm:$0xff pattern:$0x75316420]
        %vm208 = vcmask 31744
        %v209 = vsel %vm208, %v197, 0
        %vm211 = vcmask 1043456
        %v212 = vsel %vm211, %v206, 0
        %v214 = vsel %vm211, %v207, 0
        %216 = vmatpush.msra.mxu0 0.0
        %217 = vmatpush.msra.mxu0 0.0
        %218 = vmatpush.msra.mxu0 0.0
        %219 = vmatpush.msra.mxu0 0.0
        %220 = vmatpush.msra.mxu0 0.0
        %221 = vmatpush.msra.mxu0 0.0
        %222 = vmatpush.msra.mxu0 0.0
        %223 = vmatpush.msra.mxu0 0.0
        %224 = vmatpush.msra.mxu0 0.0
        %225 = vmatpush.msra.mxu0 0.0
        %226 = vmatpush.msra.mxu0 0.0
        %227 = vmatpush.msra.mxu0 0.0
        %228 = vmatpush.msra.mxu0 0.0
        %229 = vmatpush.msra.mxu0 0.0
        %230 = vmatpush.msra.mxu0 0.0
        %231 = vmatpush.msra.mxu0 %v212
        %232 = vmatmul.f32.gmra.mxu0 %v209
        %v233 = vpop.f32.mrf.mxu0
        %v234 = vadd.f32 %v202, %v233
        %235 = vdwg.mxu0
        %236 = vmatpush.msra.mxu0 0.0
        %237 = vmatpush.msra.mxu0 0.0
        %238 = vmatpush.msra.mxu0 0.0
        %239 = vmatpush.msra.mxu0 0.0
        %240 = vmatpush.msra.mxu0 0.0
        %241 = vmatpush.msra.mxu0 0.0
        %242 = vmatpush.msra.mxu0 0.0
        %243 = vmatpush.msra.mxu0 0.0
        %244 = vmatpush.msra.mxu0 0.0
        %245 = vmatpush.msra.mxu0 0.0
        %246 = vmatpush.msra.mxu0 0.0
        %247 = vmatpush.msra.mxu0 0.0
        %248 = vmatpush.msra.mxu0 0.0
        %249 = vmatpush.msra.mxu0 0.0
        %250 = vmatpush.msra.mxu0 0.0
        %251 = vmatpush.msra.mxu0 %v214
        %252 = vmatmul.f32.gmra.mxu0 %v209
        %v253 = vpop.f32.mrf.mxu0
        %v254 = vadd.f32 %v202, %v253
        %255 = vdwg.mxu0
        %v256 = vmax.f32 %v234, 0.0
        %v257 = vmax.f32 %v254, 0.0
        %v258 = vrot.slane %v256, 4
        %v259 = vrot.slane %v257, 4
        %260 = vset.pattern.permute.xlu0 5
        %261 = vperm.xlu0 %260, %v197
        %v262 = vpop.permute.xlu0 %261
        %v264 = vmul.f32 %v262, %v256
        %v265 = vmul.f32 %v262, %v257
        %266 = vset.pattern.permute.xlu0 6
        %267 = vperm.xlu0 %266, %v197
        %v268 = vpop.permute.xlu0 %267
        %v270 = vmul.f32 %v268, %v258
        %v271 = vmul.f32 %v268, %v259
        %v272 = vadd.f32 %v264, %v270
        %v273 = vadd.f32 %v265, %v271
        %274 = vset.pattern.permute.xlu0 7
        %275 = vperm.xlu0 %274, %v197
        %v276 = vpop.permute.xlu0 %275
        %v278 = vadd.f32 %v272, %v276
        %v279 = vadd.f32 %v273, %v276
        %v280 = vmax.f32 %v278, 0.0
        %v281 = vmax.f32 %v279, 0.0
        %282 = vst [vmem:[%s194] sm:$0xff] %v280
        %283 = vst [vmem:[%s194 + $0x8] sm:$0xff] %v281
        %s284 = sand.u32 %s91, 1
        %s285 = scalar_lea.sflag [#allocation4], %s284
        %s286 = sand.u32 %s91, 1
        %s287 = smul.addr %s286, 16
        %s288 = scalar_lea.vmem [#allocation7], %s287
        // Predicated region
        $region37: #{tpu_custom_call.1} parent=27 // pred_check
          %p289 = pneg %p101
        $region38: #{tpu_custom_call.1} parent=27 // pred_check_branch
          %291 = sbr.rel (%p289) target = $region40
        $region39: #{tpu_custom_call.1} parent=27 // pred_region
          %s292 = smul.u32 2, %s25
          %294 = vsyncadd %s285, 0
          %s295 = smul.addr %s24, 2
          %s296 = sadd.s32 %s292, %s295
          %s297 = smul.addr %s296, 8
          %s298 = scalar_lea.hbm %s2, %s297
          %s300 = sshll.u32 %s288, 4
          %s301 = int_to_ptr.vmem [resolvable:$true] %s300
          %s302 = sshll.u32 %s298, 4
          %s303 = int_to_ptr.hbm [resolvable:$true] %s302
          %305 = dma.vmem_to_hbm [thread:$0]  %s301, 256, %s303, %s285
        $region40: #{tpu_custom_call.1} parent=27 // pred_fallthru
          _
      $region28: #{tpu_custom_call.1} parent=5 // pred_fallthru
        _
      %p306 = scmp.le.s32.totalorder 2, %s15
      // Predicated region
      $region41: #{tpu_custom_call.1} parent=5 // pred_check
        %p307 = pneg %p306
      $region42: #{tpu_custom_call.1} parent=5 // pred_check_branch
        %309 = sbr.rel (%p307) target = $region44
      $region43: #{tpu_custom_call.1} parent=5 // pred_region
        %s310 = ssub.s32 %s15, 2
        // Predicated region
        $region45: #{tpu_custom_call.1} parent=43 // pred_check
          %p311 = pneg %p107
        $region46: #{tpu_custom_call.1} parent=43 // pred_check_branch
          %313 = sbr.rel (%p311) target = $region48
        $region47: #{tpu_custom_call.1} parent=43 // pred_region
          %s314 = sand.u32 %s92, 1
          %s315 = scalar_lea.sflag [#allocation4], %s314
          %s316 = sand.u32 %s92, 1
          %s317 = smul.addr %s316, 16
          %s318 = scalar_lea.vmem [#allocation7], %s317
          %320 = dma.done %s315, 256
        $region48: #{tpu_custom_call.1} parent=43 // pred_fallthru
          _
      $region44: #{tpu_custom_call.1} parent=5 // pred_fallthru
        _
    $region6: #{tpu_custom_call.1} parent=1 // loop_footer
      %s19 = sadd.s32 1, %s15
    $region7: #{tpu_custom_call.1} parent=1 // loop_footer_branch
      %14 = sbr.rel target = $region3
    $region8: #{tpu_custom_call.1} parent=1 // loop_exit
      _
    %321 = vsyncpa [#allocation3], 1
    %s322 = scalar_lea.sflag [#allocation3], 1
    %323 = vsyncpa %s322, 1
    %324 = vsyncpa [#allocation6], 1
    %325 = vsyncpa [#allocation4], 1
    %s326 = scalar_lea.sflag [#allocation4], 1
    %327 = vsyncpa %s326, 1

</llo_original>
